<compile_context>
chip_gen: v6e
topology: v6e:2x2x1
jax: 0.10.0
libtpu: 0.0.40
codegen_flags: <defaults>
</compile_context>

<pallas_src>
import jax
import jax.numpy as jnp
from jax.experimental import pallas as pl
from jax.experimental.pallas import tpu as pltpu


def _lstm_cell_tail(gates, c0, hc_ref, H):
    """Shared gate math; `gates` columns are in the permuted order [i, f, o, g]."""
    sig = jax.nn.sigmoid(gates[:, : 3 * H])       # one contiguous (TB, 3H) sigmoid
    g_g = jnp.tanh(gates[:, 3 * H:])              # one contiguous (TB, H) tanh
    i_g = sig[:, 0 * H:1 * H]
    f_g = sig[:, 1 * H:2 * H]
    o_g = sig[:, 2 * H:3 * H]

    c_new = f_g * c0 + i_g * g_g
    h_new = o_g * jnp.tanh(c_new)

    # Two static-slice stores; no concatenate copy.  The LSTM output `o` equals h_n
    # for seq_len == 1, so it is not materialized separately.
    hc_ref[:, :H] = h_new
    hc_ref[:, H:] = c_new


def _encoder_kernel_vmem_table(tok_ref, h0_ref, c0_ref, emb_ref, wih_ref, whh_ref,
                               b_ref, hc_ref, x_scratch):
    """Small-vocab path: embedding table resident in VMEM, in-kernel gather.

    tok_ref : (B,)  int32 SMEM (scalar-prefetched token ids, full batch)
    h0_ref, c0_ref : (TB, H) f32 VMEM tiles of the initial state
    emb_ref : (V, H)  f32 VMEM-resident table (constant-index block)
    wih_ref, whh_ref : (H, 4H) f32 transposed weights, gate cols in [i, f, o, g]
    b_ref   : (1, 4H) f32 fused bias (b_ih + b_hh), same column order
    hc_ref  : (TB, 2H) f32 output slab [h_n | c_n]
    x_scratch : (TB, H) VMEM scratch for the gathered embeddings
    """
    tb, H = x_scratch.shape
    base = pl.program_id(0) * tb

    # Embedding gather: TB dynamic-index row loads from the VMEM table.  Unrolled so
    # the store addressing stays static (for very large tiles use lax.fori_loop).
    for b in range(tb):
        idx = tok_ref[base + b]
        x_scratch[pl.ds(b, 1), :] = emb_ref[pl.ds(idx, 1), :]

    h0 = h0_ref[...]
    c0 = c0_ref[...]

    # Split matmuls: no (TB, 2H) [x|h] concatenate copy.
    gates = jnp.dot(h0, whh_ref[...], preferred_element_type=jnp.float32)
    gates = gates + jnp.dot(x_scratch[...], wih_ref[...],
                            preferred_element_type=jnp.float32)
    gates = gates + b_ref[...]

    _lstm_cell_tail(gates, c0, hc_ref, H)


def _encoder_kernel_hbm_table(tok_ref, h0_ref, c0_ref, wih_ref, whh_ref, b_ref,
                              emb_hbm, hc_ref, x_scratch, sem):
    """Large-vocab path: HBM-resident table, per-row DMA gather through one shared
    semaphore, overlapped with the h-state matmul."""
    tb, H = x_scratch.shape
    base = pl.program_id(0) * tb

    # Issue all row-gather DMAs up front (shared semaphore).  Scalar token reads all
    # happen before any .wait(), so SMEM sst->sld forwarding is not broken.
    copies = []
    for b in range(tb):
        row = tok_ref[base + b]
        cp = pltpu.make_async_copy(emb_hbm.at[row], x_scratch.at[b], sem)
        cp.start()
        copies.append(cp)

    h0 = h0_ref[...]
    c0 = c0_ref[...]

    # Hide the gather latency behind the h-state matmul + bias add.
    gates = jnp.dot(h0, whh_ref[...], preferred_element_type=jnp.float32) + b_ref[...]

    # Drain the gather only now, right before x is consumed.
    for cp in copies:
        cp.wait()
    # TODO(synk): for multi-tile grids, double-buffer x_scratch as (2, TB, H) and
    # prefetch tile i+1's rows here so the gather hides behind tile i's gate compute.

    gates = gates + jnp.dot(x_scratch[...], wih_ref[...],
                            preferred_element_type=jnp.float32)

    _lstm_cell_tail(gates, c0, hc_ref, H)


def encoder_forward(tokens, hidden, params, *, block_b=None,
                    vmem_table_limit_bytes=4 * 1024 * 1024):
    """tokens: (B,) int32; hidden: (h0, c0) each (1, B, H); params from
    pack_encoder_params.  Returns (o, (h_n, c_n)) with torch.nn.LSTM shapes."""
    emb, w_ih_t, w_hh_t, bias = params
    h0, c0 = hidden
    B = tokens.shape[0]
    V, H = emb.shape

    if block_b is None:
        # One big tile when the batch fits; cap at the MXU height (256 on v6e/v7x,
        # use 128 on v5e if tuning per-chip).
        block_b = min(B, 256)
    assert B % block_b == 0, "batch must be a multiple of the batch tile"
    assert block_b == B or block_b % 8 == 0, "partial batch tiles must be 8-aligned"
    nb = B // block_b

    tok = tokens.astype(jnp.int32)
    h0_2d = h0.reshape(B, H)
    c0_2d = c0.reshape(B, H)

    state_specs = [
        pl.BlockSpec((block_b, H), lambda i, toks: (i, 0)),   # h0 tile
        pl.BlockSpec((block_b, H), lambda i, toks: (i, 0)),   # c0 tile
    ]
    weight_specs = [
        pl.BlockSpec((H, 4 * H), lambda i, toks: (0, 0)),     # W_ih^T (broadcast)
        pl.BlockSpec((H, 4 * H), lambda i, toks: (0, 0)),     # W_hh^T (broadcast)
        pl.BlockSpec((1, 4 * H), lambda i, toks: (0, 0)),     # fused bias
    ]
    out_spec = pl.BlockSpec((block_b, 2 * H), lambda i, toks: (i, 0))

    use_vmem_table = emb.size * emb.dtype.itemsize <= vmem_table_limit_bytes

    if use_vmem_table:
        grid_spec = pltpu.PrefetchScalarGridSpec(
            num_scalar_prefetch=1,
            grid=(nb,),
            in_specs=state_specs
            + [pl.BlockSpec((V, H), lambda i, toks: (0, 0))]   # whole table in VMEM
            + weight_specs,
            out_specs=out_spec,
            scratch_shapes=[pltpu.VMEM((block_b, H), emb.dtype)],
        )
        kernel = _encoder_kernel_vmem_table
        operands = (tok, h0_2d, c0_2d, emb, w_ih_t, w_hh_t, bias)
    else:
        grid_spec = pltpu.PrefetchScalarGridSpec(
            num_scalar_prefetch=1,
            grid=(nb,),
            in_specs=state_specs
            + weight_specs
            + [pl.BlockSpec(memory_space=pl.ANY)],             # table stays in HBM
            out_specs=out_spec,
            scratch_shapes=[
                pltpu.VMEM((block_b, H), emb.dtype),
                pltpu.SemaphoreType.DMA(()),                   # one shared gather sem
            ],
        )
        kernel = _encoder_kernel_hbm_table
        operands = (tok, h0_2d, c0_2d, w_ih_t, w_hh_t, bias, emb)

    hc = pl.pallas_call(
        kernel,
        out_shape=jax.ShapeDtypeStruct((B, 2 * H), jnp.float32),
        grid_spec=grid_spec,
        compiler_params=pltpu.CompilerParams(
            dimension_semantics=("parallel",)),   # batch tiles shard across v7x TCs
    )(*operands)

    h_new = hc[:, :H]
    c_new = hc[:, H:]
    # torch.nn.LSTM shapes: output (seq=1, B, H); (h_n, c_n) each (1, B, H).
    return h_new[None], (h_new[None], c_new[None])


def init_encoder_params(key, voc_size, hidden_size):
    """Raw PyTorch-layout params: emb (V,H), w_ih/w_hh (4H,H), b_ih/b_hh (4H,),
    gate row order [i, f, g, o] as in torch.nn.LSTM."""
    k_emb, k_wih, k_whh, k_bih, k_bhh = jax.random.split(key, 5)
    bound = hidden_size ** -0.5
    emb = jax.random.normal(k_emb, (voc_size, hidden_size), jnp.float32)
    w_ih = jax.random.uniform(k_wih, (4 * hidden_size, hidden_size),
                              jnp.float32, -bound, bound)
    w_hh = jax.random.uniform(k_whh, (4 * hidden_size, hidden_size),
                              jnp.float32, -bound, bound)
    b_ih = jax.random.uniform(k_bih, (4 * hidden_size,), jnp.float32, -bound, bound)
    b_hh = jax.random.uniform(k_bhh, (4 * hidden_size,), jnp.float32, -bound, bound)
    return emb, w_ih, w_hh, b_ih, b_hh


def pack_encoder_params(raw, dtype=jnp.float32):
    """Kernel-ready params: transpose the weights, fold the biases, and permute the
    gate blocks from PyTorch's [i, f, g, o] to [i, f, o, g] so the kernel applies one
    contiguous sigmoid(3H) and one tanh(H).  On v6e/v7x pass dtype=jnp.bfloat16
    (and cast x/h before the in-kernel dots) to halve table/weight bytes."""
    emb, w_ih, w_hh, b_ih, b_hh = raw
    H = emb.shape[1]
    perm = jnp.concatenate([jnp.arange(0, 2 * H),        # i, f
                            jnp.arange(3 * H, 4 * H),    # o
                            jnp.arange(2 * H, 3 * H)])   # g
    w_ih_t = jnp.asarray(w_ih[perm].T, dtype)            # (H, 4H)
    w_hh_t = jnp.asarray(w_hh[perm].T, dtype)            # (H, 4H)
    bias = (b_ih + b_hh)[perm].reshape(1, 4 * H).astype(jnp.float32)
    return jnp.asarray(emb, dtype), w_ih_t, w_hh_t, bias


def _reference_forward(tokens, hidden, raw):
    """Pure-JAX reference in the original PyTorch layout / gate order [i, f, g, o]."""
    emb, w_ih, w_hh, b_ih, b_hh = raw
    h0, c0 = hidden
    H = emb.shape[1]
    x = emb[tokens]                                        # (B, H)
    gates = x @ w_ih.T + h0[0] @ w_hh.T + b_ih + b_hh      # (B, 4H)
    i = jax.nn.sigmoid(gates[:, 0 * H:1 * H])
    f = jax.nn.sigmoid(gates[:, 1 * H:2 * H])
    g = jnp.tanh(gates[:, 2 * H:3 * H])
    o = jax.nn.sigmoid(gates[:, 3 * H:4 * H])
    c_new = f * c0[0] + i * g
    h_new = o * jnp.tanh(c_new)
    return h_new[None], (h_new[None], c_new[None])


if __name__ == "__main__":
    VOC_SIZE = 64
    HIDDEN = 32   # demo size; use a multiple of 64 in production for lane-dense stores
    BATCH = 16

    key = jax.random.PRNGKey(0)
    k_params, k_tok, k_h, k_c = jax.random.split(key, 4)

    raw = init_encoder_params(k_params, VOC_SIZE, HIDDEN)
    packed = pack_encoder_params(raw)

    tokens = jax.random.randint(k_tok, (BATCH,), 0, VOC_SIZE, dtype=jnp.int32)
    h0 = jax.random.normal(k_h, (1, BATCH, HIDDEN), jnp.float32)
    c0 = jax.random.normal(k_c, (1, BATCH, HIDDEN), jnp.float32)

    o_ref, (hn_ref, cn_ref) = _reference_forward(tokens, (h0, c0), raw)

    # Path 1: small vocab -> table resident in VMEM, in-kernel gather.
    o1, (hn1, cn1) = encoder_forward(tokens, (h0, c0), packed)
    jax.block_until_ready((o1, hn1, cn1))
    assert o1.shape == (1, BATCH, HIDDEN) and hn1.shape == (1, BATCH, HIDDEN)
    assert jnp.allclose(o1, o_ref, atol=1e-5), "output mismatch (VMEM-table path)"
    assert jnp.allclose(hn1, hn_ref, atol=1e-5), "h_n mismatch (VMEM-table path)"
    assert jnp.allclose(cn1, cn_ref, atol=1e-5), "c_n mismatch (VMEM-table path)"

    # Path 2: force the large-vocab HBM DMA-gather path to exercise it as well.
    o2, (hn2, cn2) = encoder_forward(tokens, (h0, c0), packed,
                                     vmem_table_limit_bytes=0)
    jax.block_until_ready((o2, hn2, cn2))
    assert jnp.allclose(o2, o_ref, atol=1e-5), "output mismatch (HBM-gather path)"
    assert jnp.allclose(hn2, hn_ref, atol=1e-5), "h_n mismatch (HBM-gather path)"
    assert jnp.allclose(cn2, cn_ref, atol=1e-5), "c_n mismatch (HBM-gather path)"

    print("KERNEL_OK")
</pallas_src>

<mosaic_0001>
module attributes {stable_mosaic.version = 11 : i64} {
  func.func @_encoder_kernel_vmem_table(%arg0: i32, %arg1: memref<16xi32, #tpu.memory_space<smem>>, %arg2: memref<16x32xf32, #tpu.memory_space<vmem>>, %arg3: memref<16x32xf32, #tpu.memory_space<vmem>>, %arg4: memref<64x32xf32, #tpu.memory_space<vmem>>, %arg5: memref<32x128xf32, #tpu.memory_space<vmem>>, %arg6: memref<32x128xf32, #tpu.memory_space<vmem>>, %arg7: memref<1x128xf32, #tpu.memory_space<vmem>>, %arg8: memref<16x64xf32, #tpu.memory_space<vmem>>, %arg9: memref<16x32xf32, #tpu.memory_space<vmem>>) attributes {dimension_semantics = [#tpu.dimension_semantics<parallel>], iteration_bounds = array<i64: 1>, scalar_prefetch = 1 : i64, scratch_operands = 1 : i64, tpu.core_type = #tpu.core_type<tc>, window_params = [{transform_indices = @transform_0, window_bounds = array<i64: 16, 32>}, {transform_indices = @transform_1, window_bounds = array<i64: 16, 32>}, {pipeline_mode = #tpu.pipeline_mode<synchronous>, transform_indices = @transform_2, window_bounds = array<i64: 64, 32>}, {pipeline_mode = #tpu.pipeline_mode<synchronous>, transform_indices = @transform_3, window_bounds = array<i64: 32, 128>}, {pipeline_mode = #tpu.pipeline_mode<synchronous>, transform_indices = @transform_4, window_bounds = array<i64: 32, 128>}, {pipeline_mode = #tpu.pipeline_mode<synchronous>, transform_indices = @transform_5, window_bounds = array<i64: 1, 128>}, {transform_indices = @transform_6, window_bounds = array<i64: 16, 64>}]} {
    %c16_i32 = arith.constant 16 : i32
    %0 = arith.muli %arg0, %c16_i32 : i32
    %c0_i32 = arith.constant 0 : i32
    %1 = arith.addi %0, %c0_i32 : i32
    %2 = arith.index_cast %1 : i32 to index
    %3 = memref.load %arg1[%2] : memref<16xi32, #tpu.memory_space<smem>>
    %4 = arith.index_cast %3 : i32 to index
    %c0 = arith.constant 0 : index
    %5 = vector.load %arg4[%4, %c0] : memref<64x32xf32, #tpu.memory_space<vmem>>, vector<1x32xf32>
    %c0_0 = arith.constant 0 : index
    %c0_1 = arith.constant 0 : index
    %6 = vector.load %arg9[%c0_0, %c0_1] : memref<16x32xf32, #tpu.memory_space<vmem>>, vector<1x32xf32>
    tpu.vector_store %arg9[%c0_0, %c0_1], %5 {strides = array<i32>} : memref<16x32xf32, #tpu.memory_space<vmem>>, vector<1x32xf32>,
    %c1_i32 = arith.constant 1 : i32
    %7 = arith.addi %0, %c1_i32 : i32
    %8 = arith.index_cast %7 : i32 to index
    %9 = memref.load %arg1[%8] : memref<16xi32, #tpu.memory_space<smem>>
    %10 = arith.index_cast %9 : i32 to index
    %c0_2 = arith.constant 0 : index
    %11 = vector.load %arg4[%10, %c0_2] : memref<64x32xf32, #tpu.memory_space<vmem>>, vector<1x32xf32>
    %c1 = arith.constant 1 : index
    %c0_3 = arith.constant 0 : index
    %12 = vector.load %arg9[%c1, %c0_3] : memref<16x32xf32, #tpu.memory_space<vmem>>, vector<1x32xf32>
    tpu.vector_store %arg9[%c1, %c0_3], %11 {strides = array<i32>} : memref<16x32xf32, #tpu.memory_space<vmem>>, vector<1x32xf32>,
    %c2_i32 = arith.constant 2 : i32
    %13 = arith.addi %0, %c2_i32 : i32
    %14 = arith.index_cast %13 : i32 to index
    %15 = memref.load %arg1[%14] : memref<16xi32, #tpu.memory_space<smem>>
    %16 = arith.index_cast %15 : i32 to index
    %c0_4 = arith.constant 0 : index
    %17 = vector.load %arg4[%16, %c0_4] : memref<64x32xf32, #tpu.memory_space<vmem>>, vector<1x32xf32>
    %c2 = arith.constant 2 : index
    %c0_5 = arith.constant 0 : index
    %18 = vector.load %arg9[%c2, %c0_5] : memref<16x32xf32, #tpu.memory_space<vmem>>, vector<1x32xf32>
    tpu.vector_store %arg9[%c2, %c0_5], %17 {strides = array<i32>} : memref<16x32xf32, #tpu.memory_space<vmem>>, vector<1x32xf32>,
    %c3_i32 = arith.constant 3 : i32
    %19 = arith.addi %0, %c3_i32 : i32
    %20 = arith.index_cast %19 : i32 to index
    %21 = memref.load %arg1[%20] : memref<16xi32, #tpu.memory_space<smem>>
    %22 = arith.index_cast %21 : i32 to index
    %c0_6 = arith.constant 0 : index
    %23 = vector.load %arg4[%22, %c0_6] : memref<64x32xf32, #tpu.memory_space<vmem>>, vector<1x32xf32>
    %c3 = arith.constant 3 : index
    %c0_7 = arith.constant 0 : index
    %24 = vector.load %arg9[%c3, %c0_7] : memref<16x32xf32, #tpu.memory_space<vmem>>, vector<1x32xf32>
    tpu.vector_store %arg9[%c3, %c0_7], %23 {strides = array<i32>} : memref<16x32xf32, #tpu.memory_space<vmem>>, vector<1x32xf32>,
    %c4_i32 = arith.constant 4 : i32
    %25 = arith.addi %0, %c4_i32 : i32
    %26 = arith.index_cast %25 : i32 to index
    %27 = memref.load %arg1[%26] : memref<16xi32, #tpu.memory_space<smem>>
    %28 = arith.index_cast %27 : i32 to index
    %c0_8 = arith.constant 0 : index
    %29 = vector.load %arg4[%28, %c0_8] : memref<64x32xf32, #tpu.memory_space<vmem>>, vector<1x32xf32>
    %c4 = arith.constant 4 : index
    %c0_9 = arith.constant 0 : index
    %30 = vector.load %arg9[%c4, %c0_9] : memref<16x32xf32, #tpu.memory_space<vmem>>, vector<1x32xf32>
    tpu.vector_store %arg9[%c4, %c0_9], %29 {strides = array<i32>} : memref<16x32xf32, #tpu.memory_space<vmem>>, vector<1x32xf32>,
    %c5_i32 = arith.constant 5 : i32
    %31 = arith.addi %0, %c5_i32 : i32
    %32 = arith.index_cast %31 : i32 to index
    %33 = memref.load %arg1[%32] : memref<16xi32, #tpu.memory_space<smem>>
    %34 = arith.index_cast %33 : i32 to index
    %c0_10 = arith.constant 0 : index
    %35 = vector.load %arg4[%34, %c0_10] : memref<64x32xf32, #tpu.memory_space<vmem>>, vector<1x32xf32>
    %c5 = arith.constant 5 : index
    %c0_11 = arith.constant 0 : index
    %36 = vector.load %arg9[%c5, %c0_11] : memref<16x32xf32, #tpu.memory_space<vmem>>, vector<1x32xf32>
    tpu.vector_store %arg9[%c5, %c0_11], %35 {strides = array<i32>} : memref<16x32xf32, #tpu.memory_space<vmem>>, vector<1x32xf32>,
    %c6_i32 = arith.constant 6 : i32
    %37 = arith.addi %0, %c6_i32 : i32
    %38 = arith.index_cast %37 : i32 to index
    %39 = memref.load %arg1[%38] : memref<16xi32, #tpu.memory_space<smem>>
    %40 = arith.index_cast %39 : i32 to index
    %c0_12 = arith.constant 0 : index
    %41 = vector.load %arg4[%40, %c0_12] : memref<64x32xf32, #tpu.memory_space<vmem>>, vector<1x32xf32>
    %c6 = arith.constant 6 : index
    %c0_13 = arith.constant 0 : index
    %42 = vector.load %arg9[%c6, %c0_13] : memref<16x32xf32, #tpu.memory_space<vmem>>, vector<1x32xf32>
    tpu.vector_store %arg9[%c6, %c0_13], %41 {strides = array<i32>} : memref<16x32xf32, #tpu.memory_space<vmem>>, vector<1x32xf32>,
    %c7_i32 = arith.constant 7 : i32
    %43 = arith.addi %0, %c7_i32 : i32
    %44 = arith.index_cast %43 : i32 to index
    %45 = memref.load %arg1[%44] : memref<16xi32, #tpu.memory_space<smem>>
    %46 = arith.index_cast %45 : i32 to index
    %c0_14 = arith.constant 0 : index
    %47 = vector.load %arg4[%46, %c0_14] : memref<64x32xf32, #tpu.memory_space<vmem>>, vector<1x32xf32>
    %c7 = arith.constant 7 : index
    %c0_15 = arith.constant 0 : index
    %48 = vector.load %arg9[%c7, %c0_15] : memref<16x32xf32, #tpu.memory_space<vmem>>, vector<1x32xf32>
    tpu.vector_store %arg9[%c7, %c0_15], %47 {strides = array<i32>} : memref<16x32xf32, #tpu.memory_space<vmem>>, vector<1x32xf32>,
    %c8_i32 = arith.constant 8 : i32
    %49 = arith.addi %0, %c8_i32 : i32
    %50 = arith.index_cast %49 : i32 to index
    %51 = memref.load %arg1[%50] : memref<16xi32, #tpu.memory_space<smem>>
    %52 = arith.index_cast %51 : i32 to index
    %c0_16 = arith.constant 0 : index
    %53 = vector.load %arg4[%52, %c0_16] : memref<64x32xf32, #tpu.memory_space<vmem>>, vector<1x32xf32>
    %c8 = arith.constant 8 : index
    %c0_17 = arith.constant 0 : index
    %54 = vector.load %arg9[%c8, %c0_17] : memref<16x32xf32, #tpu.memory_space<vmem>>, vector<1x32xf32>
    tpu.vector_store %arg9[%c8, %c0_17], %53 {strides = array<i32>} : memref<16x32xf32, #tpu.memory_space<vmem>>, vector<1x32xf32>,
    %c9_i32 = arith.constant 9 : i32
    %55 = arith.addi %0, %c9_i32 : i32
    %56 = arith.index_cast %55 : i32 to index
    %57 = memref.load %arg1[%56] : memref<16xi32, #tpu.memory_space<smem>>
    %58 = arith.index_cast %57 : i32 to index
    %c0_18 = arith.constant 0 : index
    %59 = vector.load %arg4[%58, %c0_18] : memref<64x32xf32, #tpu.memory_space<vmem>>, vector<1x32xf32>
    %c9 = arith.constant 9 : index
    %c0_19 = arith.constant 0 : index
    %60 = vector.load %arg9[%c9, %c0_19] : memref<16x32xf32, #tpu.memory_space<vmem>>, vector<1x32xf32>
    tpu.vector_store %arg9[%c9, %c0_19], %59 {strides = array<i32>} : memref<16x32xf32, #tpu.memory_space<vmem>>, vector<1x32xf32>,
    %c10_i32 = arith.constant 10 : i32
    %61 = arith.addi %0, %c10_i32 : i32
    %62 = arith.index_cast %61 : i32 to index
    %63 = memref.load %arg1[%62] : memref<16xi32, #tpu.memory_space<smem>>
    %64 = arith.index_cast %63 : i32 to index
    %c0_20 = arith.constant 0 : index
    %65 = vector.load %arg4[%64, %c0_20] : memref<64x32xf32, #tpu.memory_space<vmem>>, vector<1x32xf32>
    %c10 = arith.constant 10 : index
    %c0_21 = arith.constant 0 : index
    %66 = vector.load %arg9[%c10, %c0_21] : memref<16x32xf32, #tpu.memory_space<vmem>>, vector<1x32xf32>
    tpu.vector_store %arg9[%c10, %c0_21], %65 {strides = array<i32>} : memref<16x32xf32, #tpu.memory_space<vmem>>, vector<1x32xf32>,
    %c11_i32 = arith.constant 11 : i32
    %67 = arith.addi %0, %c11_i32 : i32
    %68 = arith.index_cast %67 : i32 to index
    %69 = memref.load %arg1[%68] : memref<16xi32, #tpu.memory_space<smem>>
    %70 = arith.index_cast %69 : i32 to index
    %c0_22 = arith.constant 0 : index
    %71 = vector.load %arg4[%70, %c0_22] : memref<64x32xf32, #tpu.memory_space<vmem>>, vector<1x32xf32>
    %c11 = arith.constant 11 : index
    %c0_23 = arith.constant 0 : index
    %72 = vector.load %arg9[%c11, %c0_23] : memref<16x32xf32, #tpu.memory_space<vmem>>, vector<1x32xf32>
    tpu.vector_store %arg9[%c11, %c0_23], %71 {strides = array<i32>} : memref<16x32xf32, #tpu.memory_space<vmem>>, vector<1x32xf32>,
    %c12_i32 = arith.constant 12 : i32
    %73 = arith.addi %0, %c12_i32 : i32
    %74 = arith.index_cast %73 : i32 to index
    %75 = memref.load %arg1[%74] : memref<16xi32, #tpu.memory_space<smem>>
    %76 = arith.index_cast %75 : i32 to index
    %c0_24 = arith.constant 0 : index
    %77 = vector.load %arg4[%76, %c0_24] : memref<64x32xf32, #tpu.memory_space<vmem>>, vector<1x32xf32>
    %c12 = arith.constant 12 : index
    %c0_25 = arith.constant 0 : index
    %78 = vector.load %arg9[%c12, %c0_25] : memref<16x32xf32, #tpu.memory_space<vmem>>, vector<1x32xf32>
    tpu.vector_store %arg9[%c12, %c0_25], %77 {strides = array<i32>} : memref<16x32xf32, #tpu.memory_space<vmem>>, vector<1x32xf32>,
    %c13_i32 = arith.constant 13 : i32
    %79 = arith.addi %0, %c13_i32 : i32
    %80 = arith.index_cast %79 : i32 to index
    %81 = memref.load %arg1[%80] : memref<16xi32, #tpu.memory_space<smem>>
    %82 = arith.index_cast %81 : i32 to index
    %c0_26 = arith.constant 0 : index
    %83 = vector.load %arg4[%82, %c0_26] : memref<64x32xf32, #tpu.memory_space<vmem>>, vector<1x32xf32>
    %c13 = arith.constant 13 : index
    %c0_27 = arith.constant 0 : index
    %84 = vector.load %arg9[%c13, %c0_27] : memref<16x32xf32, #tpu.memory_space<vmem>>, vector<1x32xf32>
    tpu.vector_store %arg9[%c13, %c0_27], %83 {strides = array<i32>} : memref<16x32xf32, #tpu.memory_space<vmem>>, vector<1x32xf32>,
    %c14_i32 = arith.constant 14 : i32
    %85 = arith.addi %0, %c14_i32 : i32
    %86 = arith.index_cast %85 : i32 to index
    %87 = memref.load %arg1[%86] : memref<16xi32, #tpu.memory_space<smem>>
    %88 = arith.index_cast %87 : i32 to index
    %c0_28 = arith.constant 0 : index
    %89 = vector.load %arg4[%88, %c0_28] : memref<64x32xf32, #tpu.memory_space<vmem>>, vector<1x32xf32>
    %c14 = arith.constant 14 : index
    %c0_29 = arith.constant 0 : index
    %90 = vector.load %arg9[%c14, %c0_29] : memref<16x32xf32, #tpu.memory_space<vmem>>, vector<1x32xf32>
    tpu.vector_store %arg9[%c14, %c0_29], %89 {strides = array<i32>} : memref<16x32xf32, #tpu.memory_space<vmem>>, vector<1x32xf32>,
    %c15_i32 = arith.constant 15 : i32
    %91 = arith.addi %0, %c15_i32 : i32
    %92 = arith.index_cast %91 : i32 to index
    %93 = memref.load %arg1[%92] : memref<16xi32, #tpu.memory_space<smem>>
    %94 = arith.index_cast %93 : i32 to index
    %c0_30 = arith.constant 0 : index
    %95 = vector.load %arg4[%94, %c0_30] : memref<64x32xf32, #tpu.memory_space<vmem>>, vector<1x32xf32>
    %c15 = arith.constant 15 : index
    %c0_31 = arith.constant 0 : index
    %96 = vector.load %arg9[%c15, %c0_31] : memref<16x32xf32, #tpu.memory_space<vmem>>, vector<1x32xf32>
    tpu.vector_store %arg9[%c15, %c0_31], %95 {strides = array<i32>} : memref<16x32xf32, #tpu.memory_space<vmem>>, vector<1x32xf32>,
    %c0_32 = arith.constant 0 : index
    %c0_33 = arith.constant 0 : index
    %97 = vector.load %arg2[%c0_32, %c0_33] : memref<16x32xf32, #tpu.memory_space<vmem>>, vector<16x32xf32>
    %c0_34 = arith.constant 0 : index
    %c0_35 = arith.constant 0 : index
    %98 = vector.load %arg3[%c0_34, %c0_35] : memref<16x32xf32, #tpu.memory_space<vmem>>, vector<16x32xf32>
    %c0_36 = arith.constant 0 : index
    %c0_37 = arith.constant 0 : index
    %99 = vector.load %arg6[%c0_36, %c0_37] : memref<32x128xf32, #tpu.memory_space<vmem>>, vector<32x128xf32>
    %cst = arith.constant dense<0.000000e+00> : vector<16x128xf32>
    %100 = tpu.matmul %97, %99, %cst {dimension_numbers = #tpu.dot_dimension_numbers<[1], [0], [0], [1], [0, 0, 1, 1], [], []>} : vector<16x32xf32>, vector<32x128xf32>, vector<16x128xf32> -> vector<16x128xf32>
    %c0_38 = arith.constant 0 : index
    %c0_39 = arith.constant 0 : index
    %101 = vector.load %arg9[%c0_38, %c0_39] : memref<16x32xf32, #tpu.memory_space<vmem>>, vector<16x32xf32>
    %c0_40 = arith.constant 0 : index
    %c0_41 = arith.constant 0 : index
    %102 = vector.load %arg5[%c0_40, %c0_41] : memref<32x128xf32, #tpu.memory_space<vmem>>, vector<32x128xf32>
    %cst_42 = arith.constant dense<0.000000e+00> : vector<16x128xf32>
    %103 = tpu.matmul %101, %102, %cst_42 {dimension_numbers = #tpu.dot_dimension_numbers<[1], [0], [0], [1], [0, 0, 1, 1], [], []>} : vector<16x32xf32>, vector<32x128xf32>, vector<16x128xf32> -> vector<16x128xf32>
    %104 = arith.addf %100, %103 : vector<16x128xf32>
    %c0_43 = arith.constant 0 : index
    %c0_44 = arith.constant 0 : index
    %105 = vector.load %arg7[%c0_43, %c0_44] : memref<1x128xf32, #tpu.memory_space<vmem>>, vector<1x128xf32>
    %106 = vector.broadcast %105 : vector<1x128xf32> to vector<16x128xf32>
    %107 = arith.addf %104, %106 : vector<16x128xf32>
    %108 = vector.extract_strided_slice %107 {offsets = [0, 0], sizes = [16, 96], strides = [1, 1]} : vector<16x128xf32> to vector<16x96xf32>
    %109 = arith.negf %108 : vector<16x96xf32>
    %110 = math.exp %109 : vector<16x96xf32>
    %cst_45 = arith.constant 1.000000e+00 : f32
    %111 = vector.broadcast %cst_45 : f32 to vector<16x96xf32>
    %112 = arith.addf %111, %110 : vector<16x96xf32>
    %113 = arith.divf %111, %112 : vector<16x96xf32>
    %114 = vector.extract_strided_slice %107 {offsets = [0, 96], sizes = [16, 32], strides = [1, 1]} : vector<16x128xf32> to vector<16x32xf32>
    %115 = math.tanh %114 : vector<16x32xf32>
    %116 = vector.extract_strided_slice %113 {offsets = [0, 0], sizes = [16, 32], strides = [1, 1]} : vector<16x96xf32> to vector<16x32xf32>
    %117 = vector.extract_strided_slice %113 {offsets = [0, 32], sizes = [16, 32], strides = [1, 1]} : vector<16x96xf32> to vector<16x32xf32>
    %118 = vector.extract_strided_slice %113 {offsets = [0, 64], sizes = [16, 32], strides = [1, 1]} : vector<16x96xf32> to vector<16x32xf32>
    %119 = arith.mulf %117, %98 : vector<16x32xf32>
    %120 = arith.mulf %116, %115 : vector<16x32xf32>
    %121 = arith.addf %119, %120 : vector<16x32xf32>
    %122 = math.tanh %121 : vector<16x32xf32>
    %123 = arith.mulf %118, %122 : vector<16x32xf32>
    %c0_46 = arith.constant 0 : index
    %c0_47 = arith.constant 0 : index
    %124 = vector.load %arg8[%c0_46, %c0_47] : memref<16x64xf32, #tpu.memory_space<vmem>>, vector<16x32xf32>
    tpu.vector_store %arg8[%c0_46, %c0_47], %123 {strides = array<i32>} : memref<16x64xf32, #tpu.memory_space<vmem>>, vector<16x32xf32>,
    %c0_48 = arith.constant 0 : index
    %c32 = arith.constant 32 : index
    %125 = vector.load %arg8[%c0_48, %c32] : memref<16x64xf32, #tpu.memory_space<vmem>>, vector<16x32xf32>
    tpu.vector_store %arg8[%c0_48, %c32], %121 {strides = array<i32>} : memref<16x64xf32, #tpu.memory_space<vmem>>, vector<16x32xf32>,
    return
  }
  func.func @transform_0(%arg0: i32, %arg1: memref<16xi32, #tpu.memory_space<smem>>) -> (i32, i32) {
    %c0_i32 = arith.constant 0 : i32
    %c0_i32_0 = arith.constant 0 : i32
    return %arg0, %c0_i32 : i32, i32
  }
  func.func @transform_1(%arg0: i32, %arg1: memref<16xi32, #tpu.memory_space<smem>>) -> (i32, i32) {
    %c0_i32 = arith.constant 0 : i32
    %c0_i32_0 = arith.constant 0 : i32
    return %arg0, %c0_i32 : i32, i32
  }
  func.func @transform_2(%arg0: i32, %arg1: memref<16xi32, #tpu.memory_space<smem>>) -> (i32, i32) {
    %c0_i32 = arith.constant 0 : i32
    %c0_i32_0 = arith.constant 0 : i32
    %c0_i32_1 = arith.constant 0 : i32
    return %c0_i32, %c0_i32_0 : i32, i32
  }
  func.func @transform_3(%arg0: i32, %arg1: memref<16xi32, #tpu.memory_space<smem>>) -> (i32, i32) {
    %c0_i32 = arith.constant 0 : i32
    %c0_i32_0 = arith.constant 0 : i32
    %c0_i32_1 = arith.constant 0 : i32
    return %c0_i32, %c0_i32_0 : i32, i32
  }
  func.func @transform_4(%arg0: i32, %arg1: memref<16xi32, #tpu.memory_space<smem>>) -> (i32, i32) {
    %c0_i32 = arith.constant 0 : i32
    %c0_i32_0 = arith.constant 0 : i32
    %c0_i32_1 = arith.constant 0 : i32
    return %c0_i32, %c0_i32_0 : i32, i32
  }
  func.func @transform_5(%arg0: i32, %arg1: memref<16xi32, #tpu.memory_space<smem>>) -> (i32, i32) {
    %c0_i32 = arith.constant 0 : i32
    %c0_i32_0 = arith.constant 0 : i32
    %c0_i32_1 = arith.constant 0 : i32
    return %c0_i32, %c0_i32_0 : i32, i32
  }
  func.func @transform_6(%arg0: i32, %arg1: memref<16xi32, #tpu.memory_space<smem>>) -> (i32, i32) {
    %c0_i32 = arith.constant 0 : i32
    %c0_i32_0 = arith.constant 0 : i32
    return %arg0, %c0_i32 : i32, i32
  }
}

</mosaic_0001>

<llo_original>
// kernel: tpu_custom_call.1
$region0: #{tpu_custom_call.1}
  #allocation0 [shape = 'u32[]', space=smem, size = 0x4, offset = 0x4, fixed_abs, tag = 'smem constant byte address 0x4 - core index']
  #allocation1 [shape = 'u32[144,128]{1,0:T(1,128)}', space=vmem, size = 0x12000, scoped, tag = 'internal scratch']
  #allocation2 [shape = 'f32[16,32]{1,0:T(8,128)}', space=vmem, size = 0x2000, scoped, tag = 'scratch operand']
  #allocation3 [shape = 's32[1]{0}', space=sflag, size = 0x4, scoped, tag = 'scoped memory for tpu_custom_call.1']
  #allocation4 [shape = 'u8[512]{0}', space=smem, size = 0x200, scoped, tag = 'prefetched SMEM operand 0']
  %s0 = inlined_call_operand.hbm [shape: s32[16], index: 0, kind: input, shape index: {}]
  %s1 = inlined_call_operand.vmem [shape: f32[16,32], index: 1, kind: input, shape index: {}]
  %s2 = inlined_call_operand.vmem [shape: f32[16,32], index: 2, kind: input, shape index: {}]
  %s3 = inlined_call_operand.vmem [shape: f32[64,32], index: 3, kind: input, shape index: {}]
  %s4 = inlined_call_operand.vmem [shape: f32[32,128], index: 4, kind: input, shape index: {}]
  %s5 = inlined_call_operand.vmem [shape: f32[32,128], index: 5, kind: input, shape index: {}]
  %s6 = inlined_call_operand.vmem [shape: f32[1,128], index: 6, kind: input, shape index: {}]
  %s7 = inlined_call_operand.hbm [shape: f32[16,64], index: 7, kind: output, shape index: {}]
  %s8 = sld [smem:[#allocation0]]
  $region34: #{tpu_custom_call.1} parent=0
    _
  %s10 = ssub.s32 1, %s8
  %s11 = scalar_select 0, %s10, %s8
  %13 = dma.hbm_to_smem %s0, 16, [#allocation4], [#allocation3]
  %14 = dma.done [#allocation3], 16
  %15 = sfence
  $region1: #{tpu_custom_call.1} parent=0
    #allocation5 [shape = 'u8[8192]{0}', space=vmem, size = 0x2000, scoped, tag = 'output window, operand 0, single buffered']
    #allocation6 [shape = 's32[1]{0}', space=sflag, size = 0x4, scoped, tag = 'scoped memory for tpu_custom_call.1']
    %16 = vsyncpa [#allocation6], 0
    // Predicated region
    $region2: #{tpu_custom_call.1} parent=1 // pred_check
      _
    $region3: #{tpu_custom_call.1} parent=1 // pred_check_branch
      %18 = sbr.rel (0) target = $region5
    $region4: #{tpu_custom_call.1} parent=1 // pred_region
      _
    $region5: #{tpu_custom_call.1} parent=1 // pred_fallthru
      _
    // Predicated region
    $region6: #{tpu_custom_call.1} parent=1 // pred_check
      _
    $region7: #{tpu_custom_call.1} parent=1 // pred_check_branch
      %20 = sbr.rel (0) target = $region9
    $region8: #{tpu_custom_call.1} parent=1 // pred_region
      _
    $region9: #{tpu_custom_call.1} parent=1 // pred_fallthru
      _
    // Predicated region
    $region10: #{tpu_custom_call.1} parent=1 // pred_check
      _
    $region11: #{tpu_custom_call.1} parent=1 // pred_check_branch
      %22 = sbr.rel (0) target = $region13
    $region12: #{tpu_custom_call.1} parent=1 // pred_region
      _
    $region13: #{tpu_custom_call.1} parent=1 // pred_fallthru
      _
    // Predicated region
    $region14: #{tpu_custom_call.1} parent=1 // pred_check
      _
    $region15: #{tpu_custom_call.1} parent=1 // pred_check_branch
      %24 = sbr.rel (0) target = $region17
    $region16: #{tpu_custom_call.1} parent=1 // pred_region
      _
    $region17: #{tpu_custom_call.1} parent=1 // pred_fallthru
      _
    // Predicated region
    $region18: #{tpu_custom_call.1} parent=1 // pred_check
      _
    $region19: #{tpu_custom_call.1} parent=1 // pred_check_branch
      %26 = sbr.rel (0) target = $region21
    $region20: #{tpu_custom_call.1} parent=1 // pred_region
      _
    $region21: #{tpu_custom_call.1} parent=1 // pred_fallthru
      _
    // Predicated region
    $region22: #{tpu_custom_call.1} parent=1 // pred_check
      _
    $region23: #{tpu_custom_call.1} parent=1 // pred_check_branch
      %28 = sbr.rel (0) target = $region25
    $region24: #{tpu_custom_call.1} parent=1 // pred_region
      _
    $region25: #{tpu_custom_call.1} parent=1 // pred_fallthru
      _
    %s29 = smul.u32 0, 16
    %s30 = sld [smem:[#allocation4 + %s29]]
    %s31 = scalar_lea.vmem %s3, %s30
    %v32 = vld [vmem:[%s31] sm:$0x1]
    %vm33 = vcmask 253952
    %34 = vst.msk [vmem:[#allocation2] sm:$0x1] %vm33, %v32
    %s35 = sadd.s32 %s29, 1
    %s36 = sld [smem:[#allocation4 + %s35]]
    %s37 = scalar_lea.vmem %s3, %s36
    %v38 = vld [vmem:[%s37] sm:$0x1]
    %39 = vst.msk [vmem:[#allocation2 + $0x1] sm:$0x1] %vm33, %v38
    %s40 = sadd.s32 %s29, 2
    %s41 = sld [smem:[#allocation4 + %s40]]
    %s42 = scalar_lea.vmem %s3, %s41
    %v43 = vld [vmem:[%s42] sm:$0x1]
    %44 = vst.msk [vmem:[#allocation2 + $0x2] sm:$0x1] %vm33, %v43
    %s45 = sadd.s32 %s29, 3
    %s46 = sld [smem:[#allocation4 + %s45]]
    %s47 = scalar_lea.vmem %s3, %s46
    %v48 = vld [vmem:[%s47] sm:$0x1]
    %49 = vst.msk [vmem:[#allocation2 + $0x3] sm:$0x1] %vm33, %v48
    %s50 = sadd.s32 %s29, 4
    %s51 = sld [smem:[#allocation4 + %s50]]
    %s52 = scalar_lea.vmem %s3, %s51
    %v53 = vld [vmem:[%s52] sm:$0x1]
    %54 = vst.msk [vmem:[#allocation2 + $0x4] sm:$0x1] %vm33, %v53
    %s55 = sadd.s32 %s29, 5
    %s56 = sld [smem:[#allocation4 + %s55]]
    %s57 = scalar_lea.vmem %s3, %s56
    %v58 = vld [vmem:[%s57] sm:$0x1]
    %59 = vst.msk [vmem:[#allocation2 + $0x5] sm:$0x1] %vm33, %v58
    %s60 = sadd.s32 %s29, 6
    %s61 = sld [smem:[#allocation4 + %s60]]
    %s62 = scalar_lea.vmem %s3, %s61
    %v63 = vld [vmem:[%s62] sm:$0x1]
    %64 = vst.msk [vmem:[#allocation2 + $0x6] sm:$0x1] %vm33, %v63
    %s65 = sadd.s32 %s29, 7
    %s66 = sld [smem:[#allocation4 + %s65]]
    %s67 = scalar_lea.vmem %s3, %s66
    %v68 = vld [vmem:[%s67] sm:$0x1]
    %69 = vst.msk [vmem:[#allocation2 + $0x7] sm:$0x1] %vm33, %v68
    %s70 = sadd.s32 %s29, 8
    %s71 = sld [smem:[#allocation4 + %s70]]
    %s72 = scalar_lea.vmem %s3, %s71
    %v73 = vld [vmem:[%s72] sm:$0x1]
    %74 = vst.msk [vmem:[#allocation2 + $0x8] sm:$0x1] %vm33, %v73
    %s75 = sadd.s32 %s29, 9
    %s76 = sld [smem:[#allocation4 + %s75]]
    %s77 = scalar_lea.vmem %s3, %s76
    %v78 = vld [vmem:[%s77] sm:$0x1]
    %79 = vst.msk [vmem:[#allocation2 + $0x9] sm:$0x1] %vm33, %v78
    %s80 = sadd.s32 %s29, 10
    %s81 = sld [smem:[#allocation4 + %s80]]
    %s82 = scalar_lea.vmem %s3, %s81
    %v83 = vld [vmem:[%s82] sm:$0x1]
    %84 = vst.msk [vmem:[#allocation2 + $0xa] sm:$0x1] %vm33, %v83
    %s85 = sadd.s32 %s29, 11
    %s86 = sld [smem:[#allocation4 + %s85]]
    %s87 = scalar_lea.vmem %s3, %s86
    %v88 = vld [vmem:[%s87] sm:$0x1]
    %89 = vst.msk [vmem:[#allocation2 + $0xb] sm:$0x1] %vm33, %v88
    %s90 = sadd.s32 %s29, 12
    %s91 = sld [smem:[#allocation4 + %s90]]
    %s92 = scalar_lea.vmem %s3, %s91
    %v93 = vld [vmem:[%s92] sm:$0x1]
    %94 = vst.msk [vmem:[#allocation2 + $0xc] sm:$0x1] %vm33, %v93
    %s95 = sadd.s32 %s29, 13
    %s96 = sld [smem:[#allocation4 + %s95]]
    %s97 = scalar_lea.vmem %s3, %s96
    %v98 = vld [vmem:[%s97] sm:$0x1]
    %99 = vst.msk [vmem:[#allocation2 + $0xd] sm:$0x1] %vm33, %v98
    %s100 = sadd.s32 %s29, 14
    %s101 = sld [smem:[#allocation4 + %s100]]
    %s102 = scalar_lea.vmem %s3, %s101
    %v103 = vld [vmem:[%s102] sm:$0x1]
    %104 = vst.msk [vmem:[#allocation2 + $0xe] sm:$0x1] %vm33, %v103
    %s105 = sadd.s32 %s29, 15
    %s106 = sld [smem:[#allocation4 + %s105]]
    %s107 = scalar_lea.vmem %s3, %s106
    %v108 = vld [vmem:[%s107] sm:$0x1]
    %109 = vst.msk [vmem:[#allocation2 + $0xf] sm:$0x1] %vm33, %v108
    %v110 = vld [vmem:[%s1] sm:$0xff]
    %v111 = vld [vmem:[%s1 + $0x8] sm:$0xff]
    %v112 = vld [vmem:[%s2] sm:$0xff]
    %v113 = vld [vmem:[%s2 + $0x8] sm:$0xff]
    %v114 = vld [vmem:[%s5] sm:$0xff]
    %v115 = vld [vmem:[%s5 + $0x8] sm:$0xff]
    %v116 = vld [vmem:[%s5 + $0x10] sm:$0xff]
    %v117 = vld [vmem:[%s5 + $0x18] sm:$0xff]
    %v118 = vld [vmem:[#allocation2] sm:$0xff]
    %v119 = vld [vmem:[#allocation2 + $0x8] sm:$0xff]
    %v120 = vld [vmem:[%s4] sm:$0xff]
    %v121 = vld [vmem:[%s4 + $0x8] sm:$0xff]
    %v122 = vld [vmem:[%s4 + $0x10] sm:$0xff]
    %v123 = vld [vmem:[%s4 + $0x18] sm:$0xff]
    %vm124 = vcmask 261120
    %v126 = vsel %vm124, %v118, 0
    %v129 = vsel %vm124, %v119, 0
    %131 = vmatprep.subr.mxu0 0.0
    %132 = vmatpush1.msra.mxu0 0.0
    %133 = vmatprep.subr.mxu0 0.0
    %134 = vmatpush1.msra.mxu0 0.0
    %135 = vmatprep.subr.mxu0 0.0
    %136 = vmatpush1.msra.mxu0 0.0
    %137 = vmatprep.subr.mxu0 0.0
    %138 = vmatpush1.msra.mxu0 0.0
    %139 = vmatprep.subr.mxu0 0.0
    %140 = vmatpush1.msra.mxu0 0.0
    %141 = vmatprep.subr.mxu0 0.0
    %142 = vmatpush1.msra.mxu0 0.0
    %143 = vmatprep.subr.mxu0 0.0
    %144 = vmatpush1.msra.mxu0 0.0
    %145 = vmatprep.subr.mxu0 0.0
    %146 = vmatpush1.msra.mxu0 0.0
    %147 = vmatprep.subr.mxu0 0.0
    %148 = vmatpush1.msra.mxu0 0.0
    %149 = vmatprep.subr.mxu0 0.0
    %150 = vmatpush1.msra.mxu0 0.0
    %151 = vmatprep.subr.mxu0 0.0
    %152 = vmatpush1.msra.mxu0 0.0
    %153 = vmatprep.subr.mxu0 0.0
    %154 = vmatpush1.msra.mxu0 0.0
    %155 = vmatprep.subr.mxu0 0.0
    %156 = vmatpush1.msra.mxu0 %v123
    %157 = vmatprep.subr.mxu0 0.0
    %158 = vmatpush1.msra.mxu0 %v122
    %159 = vmatprep.subr.mxu0 0.0
    %160 = vmatpush1.msra.mxu0 %v121
    %161 = vmatprep.subr.mxu0 0.0
    %162 = vmatpush1.msra.mxu0 %v120
    %163 = vmatprep.subr.mxu0 0.0
    %164 = vmatpush2.msra.mxu0 0.0
    %165 = vmatprep.subr.mxu0 0.0
    %166 = vmatpush2.msra.mxu0 0.0
    %167 = vmatprep.subr.mxu0 0.0
    %168 = vmatpush2.msra.mxu0 0.0
    %169 = vmatprep.subr.mxu0 0.0
    %170 = vmatpush2.msra.mxu0 0.0
    %171 = vmatprep.subr.mxu0 0.0
    %172 = vmatpush2.msra.mxu0 0.0
    %173 = vmatprep.subr.mxu0 0.0
    %174 = vmatpush2.msra.mxu0 0.0
    %175 = vmatprep.subr.mxu0 0.0
    %176 = vmatpush2.msra.mxu0 0.0
    %177 = vmatprep.subr.mxu0 0.0
    %178 = vmatpush2.msra.mxu0 0.0
    %179 = vmatprep.subr.mxu0 0.0
    %180 = vmatpush2.msra.mxu0 0.0
    %181 = vmatprep.subr.mxu0 0.0
    %182 = vmatpush2.msra.mxu0 0.0
    %183 = vmatprep.subr.mxu0 0.0
    %184 = vmatpush2.msra.mxu0 0.0
    %185 = vmatprep.subr.mxu0 0.0
    %186 = vmatpush2.msra.mxu0 0.0
    %187 = vmatprep.subr.mxu0 0.0
    %188 = vmatpush2.msra.mxu0 0.0
    %189 = vmatprep.subr.mxu0 0.0
    %190 = vmatpush2.msra.mxu0 0.0
    %191 = vmatprep.subr.mxu0 0.0
    %192 = vmatpush2.msra.mxu0 0.0
    %193 = vmatprep.subr.mxu0 0.0
    %194 = vmatpush2.msra.mxu0 0.0
    %195 = vmatprep.mubr.f32.mxu0 0.0
    %196 = vmatmul.mubr.f32.gmra.mxu0 %v126
    %v197 = vpop.f32.mrf.mxu0
    %v198 = vadd.f32 0.0, %v197
    %v199 = vpop.f32.mrf.mxu0
    %200 = vmatprep.mubr.f32.mxu0 0.0
    %201 = vmatmul.mubr.f32.gmra.mxu0 %v129
    %v202 = vpop.f32.mrf.mxu0
    %v203 = vadd.f32 0.0, %v202
    %v204 = vpop.f32.mrf.mxu0
    %205 = vdwg.mxu0
    %v207 = vsel %vm124, %v110, 0
    %v210 = vsel %vm124, %v111, 0
    %212 = vmatprep.subr.mxu0 0.0
    %213 = vmatpush1.msra.mxu0 0.0
    %214 = vmatprep.subr.mxu0 0.0
    %215 = vmatpush1.msra.mxu0 0.0
    %216 = vmatprep.subr.mxu0 0.0
    %217 = vmatpush1.msra.mxu0 0.0
    %218 = vmatprep.subr.mxu0 0.0
    %219 = vmatpush1.msra.mxu0 0.0
    %220 = vmatprep.subr.mxu0 0.0
    %221 = vmatpush1.msra.mxu0 0.0
    %222 = vmatprep.subr.mxu0 0.0
    %223 = vmatpush1.msra.mxu0 0.0
    %224 = vmatprep.subr.mxu0 0.0
    %225 = vmatpush1.msra.mxu0 0.0
    %226 = vmatprep.subr.mxu0 0.0
    %227 = vmatpush1.msra.mxu0 0.0
    %228 = vmatprep.subr.mxu0 0.0
    %229 = vmatpush1.msra.mxu0 0.0
    %230 = vmatprep.subr.mxu0 0.0
    %231 = vmatpush1.msra.mxu0 0.0
    %232 = vmatprep.subr.mxu0 0.0
    %233 = vmatpush1.msra.mxu0 0.0
    %234 = vmatprep.subr.mxu0 0.0
    %235 = vmatpush1.msra.mxu0 0.0
    %236 = vmatprep.subr.mxu0 0.0
    %237 = vmatpush1.msra.mxu0 %v117
    %238 = vmatprep.subr.mxu0 0.0
    %239 = vmatpush1.msra.mxu0 %v116
    %240 = vmatprep.subr.mxu0 0.0
    %241 = vmatpush1.msra.mxu0 %v115
    %242 = vmatprep.subr.mxu0 0.0
    %243 = vmatpush1.msra.mxu0 %v114
    %244 = vmatprep.subr.mxu0 0.0
    %245 = vmatpush2.msra.mxu0 0.0
    %246 = vmatprep.subr.mxu0 0.0
    %247 = vmatpush2.msra.mxu0 0.0
    %248 = vmatprep.subr.mxu0 0.0
    %249 = vmatpush2.msra.mxu0 0.0
    %250 = vmatprep.subr.mxu0 0.0
    %251 = vmatpush2.msra.mxu0 0.0
    %252 = vmatprep.subr.mxu0 0.0
    %253 = vmatpush2.msra.mxu0 0.0
    %254 = vmatprep.subr.mxu0 0.0
    %255 = vmatpush2.msra.mxu0 0.0
    %256 = vmatprep.subr.mxu0 0.0
    %257 = vmatpush2.msra.mxu0 0.0
    %258 = vmatprep.subr.mxu0 0.0
    %259 = vmatpush2.msra.mxu0 0.0
    %260 = vmatprep.subr.mxu0 0.0
    %261 = vmatpush2.msra.mxu0 0.0
    %262 = vmatprep.subr.mxu0 0.0
    %263 = vmatpush2.msra.mxu0 0.0
    %264 = vmatprep.subr.mxu0 0.0
    %265 = vmatpush2.msra.mxu0 0.0
    %266 = vmatprep.subr.mxu0 0.0
    %267 = vmatpush2.msra.mxu0 0.0
    %268 = vmatprep.subr.mxu0 0.0
    %269 = vmatpush2.msra.mxu0 0.0
    %270 = vmatprep.subr.mxu0 0.0
    %271 = vmatpush2.msra.mxu0 0.0
    %272 = vmatprep.subr.mxu0 0.0
    %273 = vmatpush2.msra.mxu0 0.0
    %274 = vmatprep.subr.mxu0 0.0
    %275 = vmatpush2.msra.mxu0 0.0
    %276 = vmatprep.mubr.f32.mxu0 0.0
    %277 = vmatmul.mubr.f32.gmra.mxu0 %v207
    %v278 = vpop.f32.mrf.mxu0
    %v279 = vadd.f32 %v198, %v278
    %v280 = vpop.f32.mrf.mxu0
    %281 = vmatprep.mubr.f32.mxu0 0.0
    %282 = vmatmul.mubr.f32.gmra.mxu0 %v210
    %v283 = vpop.f32.mrf.mxu0
    %v284 = vadd.f32 %v203, %v283
    %v285 = vpop.f32.mrf.mxu0
    %286 = vdwg.mxu0
    %v287 = vld [vmem:[%s6] sm:$0x1]
    %v289 = vlaneseq
    %v290 = vshrl.u32 %v289, 7
    %v291 = vsub.s32 0, %v290
    %v292 = vrot.slane %v287, %v291
    %v294 = vadd.f32 %v279, %v292
    %v295 = vadd.f32 %v284, %v292
    %v296 = vxor.u32 %v294, 2147483648
    %v297 = vxor.u32 %v295, 2147483648
    %v298 = vmul.f32 %v296, 1.442695
    %v299 = vpow.pop %v298
    %v300 = vmul.f32 %v297, 1.442695
    %v301 = vpow.pop %v300
    %v302 = vadd.f32 %v299, 1.0
    %v303 = vadd.f32 %v301, 1.0
    %v304 = vrcp.pop %v302
    %v305 = vmul.f32 1.0, %v304
    %v306 = vrcp.pop %v303
    %v307 = vmul.f32 1.0, %v306
    %v308 = vtanh.pop %v294
    %v309 = vtanh.pop %v295
    %312 = vrot.lane.b32.xlu0 %v112, 32
    %v313 = vpop.permute.xlu0 %312
    %314 = vrot.lane.b32.xlu0 %v113, 32
    %v315 = vpop.permute.xlu0 %314
    %v318 = vmul.f32 %v305, %v313
    %v319 = vmul.f32 %v307, %v315
    %322 = vrot.lane.b32.xlu0 %v308, 32
    %v323 = vpop.permute.xlu0 %322
    %324 = vrot.lane.b32.xlu0 %v309, 32
    %v325 = vpop.permute.xlu0 %324
    %v328 = vmul.f32 %v305, %v323
    %v329 = vmul.f32 %v307, %v325
    %332 = vrot.lane.b32.xlu0 %v328, 32
    %v333 = vpop.permute.xlu0 %332
    %334 = vrot.lane.b32.xlu0 %v329, 32
    %v335 = vpop.permute.xlu0 %334
    %v338 = vadd.f32 %v318, %v333
    %v339 = vadd.f32 %v319, %v335
    %v340 = vtanh.pop %v338
    %v341 = vtanh.pop %v339
    %344 = vrot.lane.b32.xlu0 %v340, 32
    %v345 = vpop.permute.xlu0 %344
    %346 = vrot.lane.b32.xlu0 %v341, 32
    %v347 = vpop.permute.xlu0 %346
    %v350 = vmul.f32 %v305, %v345
    %v351 = vmul.f32 %v307, %v347
    %354 = vrot.lane.b32.xlu0 %v350, 64
    %v355 = vpop.permute.xlu0 %354
    %356 = vrot.lane.b32.xlu0 %v351, 64
    %v357 = vpop.permute.xlu0 %356
    %360 = vst.msk [vmem:[#allocation5] sm:$0xff] %vm124, %v355
    %361 = vst.msk [vmem:[#allocation5 + $0x8] sm:$0xff] %vm124, %v357
    %vm362 = vcmask 523520
    %363 = vst.msk [vmem:[#allocation5] sm:$0xff] %vm362, %v338
    %364 = vst.msk [vmem:[#allocation5 + $0x8] sm:$0xff] %vm362, %v339
    // Predicated region
    $region26: #{tpu_custom_call.1} parent=1 // pred_check
      _
    $region27: #{tpu_custom_call.1} parent=1 // pred_check_branch
      %366 = sbr.rel (0) target = $region29
    $region28: #{tpu_custom_call.1} parent=1 // pred_region
      %s368 = ssub.s32 256, 256
      %369 = vsyncadd [#allocation6], %s368
      %s370 = sshll.u32 [#allocation5], 4
      %s371 = int_to_ptr.vmem [resolvable:$true] %s370
      %376 = dma.vmem_to_hbm [thread:$0]  %s371, 256, %s7, [#allocation6], 128, 128, 8
    $region29: #{tpu_custom_call.1} parent=1 // pred_fallthru
      _
    // Predicated region
    $region30: #{tpu_custom_call.1} parent=1 // pred_check
      _
    $region31: #{tpu_custom_call.1} parent=1 // pred_check_branch
      %378 = sbr.rel (0) target = $region33
    $region32: #{tpu_custom_call.1} parent=1 // pred_region
      %379 = dma.done [#allocation6], 256
    $region33: #{tpu_custom_call.1} parent=1 // pred_fallthru
      _
    %380 = vsyncpa [#allocation6], 1

</llo_original>
